<compile_context>
chip_gen: v5e
topology: v5e:2x2
jax: 0.10.0
libtpu: 0.0.40
codegen_flags: <defaults>
</compile_context>

<pallas_src>
import jax
import jax.numpy as jnp
from jax.experimental import pallas as pl
from jax.experimental.pallas import tpu as pltpu


def _attention_kernel(q_ref, c_ref, wm_ref, wq_ref, out_ref, attn_ref):
    # q_ref:    (Bb, L_out, D)
    # c_ref:    (Bb, L_ctx, D)
    # wm_ref:   (D, D)   == W[:, :D].T   (pre-transposed in the wrapper)
    # wq_ref:   (D, D)   == W[:, D:].T
    # out_ref:  (Bb, L_out, D)
    # attn_ref: (Bb, L_out, L_ctx)
    q = q_ref[...]                                   # (Bb, L_out, D)  f32
    c = c_ref[...]                                   # (Bb, L_ctx, D)  f32

    # attention_scores[b, o, k] = sum_d q[b, o, d] * c[b, k, d]
    # (contraction on the last dims — no transpose materialised)
    scores = jnp.einsum("bod,bkd->bok", q, c,
                        preferred_element_type=jnp.float32)   # (Bb, L_out, L_ctx)

    # numerically-stable softmax over the context axis (exact division — the
    # approx EUP reciprocal was not accurate enough for 1e-4 tolerance).
    scores = scores - jnp.max(scores, axis=-1, keepdims=True)
    e = jnp.exp(scores)
    weights = e / jnp.sum(e, axis=-1, keepdims=True)          # (Bb, L_out, L_ctx)

    # mix[b, o, d] = sum_k weights[b, o, k] * c[b, k, d]
    mix = jnp.einsum("bok,bkd->bod", weights, c,
                     preferred_element_type=jnp.float32)       # (Bb, L_out, D)

    # output = tanh(cat([mix, q], -1) @ W.T)
    #        = tanh(mix @ W[:, :D].T + q @ W[:, D:].T)   (concat-free)
    out = (jnp.einsum("bod,de->boe", mix, wm_ref[...],
                      preferred_element_type=jnp.float32)
           + jnp.einsum("bod,de->boe", q, wq_ref[...],
                        preferred_element_type=jnp.float32))   # (Bb, L_out, D)

    out_ref[...] = jnp.tanh(out).astype(out_ref.dtype)
    attn_ref[...] = weights.astype(attn_ref.dtype)


def _pick_batch_block(B, L_out, L_ctx, D, vmem_budget_bytes=8 * 1024 * 1024):
    """Largest divisor of B whose (double-buffered) block footprint fits the budget."""
    itemsize = 4  # f32
    best = 1
    for bb in range(1, B + 1):
        if B % bb:
            continue
        per_step = bb * (L_out * D + L_ctx * D + L_out * D + L_out * L_ctx) * itemsize
        footprint = 2 * per_step + 2 * (D * D) * itemsize  # 2x-buffered blocks + weights
        if footprint <= vmem_budget_bytes:
            best = bb
    return best


def attention_model(query, context, w_linear, *, batch_block=None):
    """query: (B, L_out, D), context: (B, L_ctx, D), w_linear: (D, 2D)."""
    B, L_out, D = query.shape
    _, L_ctx, _ = context.shape
    assert w_linear.shape == (D, 2 * D)

    # Split + pre-transpose the projection weight once (grid-invariant; keeps
    # all in-kernel work on the MXU, no per-step XLU transpose or concat).
    w_mix_t = jnp.asarray(w_linear[:, :D].T)   # (D, D)
    w_q_t = jnp.asarray(w_linear[:, D:].T)     # (D, D)

    Bb = batch_block if batch_block is not None else _pick_batch_block(B, L_out, L_ctx, D)
    assert B % Bb == 0, "batch_block must divide B"
    grid = (B // Bb,)

    out_shapes = (
        jax.ShapeDtypeStruct((B, L_out, D), query.dtype),
        jax.ShapeDtypeStruct((B, L_out, L_ctx), jnp.float32),
    )

    grid_spec = pltpu.PrefetchScalarGridSpec(
        num_scalar_prefetch=0,
        grid=grid,
        in_specs=[
            pl.BlockSpec((Bb, L_out, D), lambda b: (b, 0, 0)),
            pl.BlockSpec((Bb, L_ctx, D), lambda b: (b, 0, 0)),
            pl.BlockSpec((D, D), lambda b: (0, 0)),
            pl.BlockSpec((D, D), lambda b: (0, 0)),
        ],
        out_specs=[
            pl.BlockSpec((Bb, L_out, D), lambda b: (b, 0, 0)),
            pl.BlockSpec((Bb, L_out, L_ctx), lambda b: (b, 0, 0)),
        ],
    )

    return pl.pallas_call(
        _attention_kernel,
        out_shape=out_shapes,
        grid_spec=grid_spec,
        compiler_params=pltpu.CompilerParams(
            dimension_semantics=("parallel",)),
    )(query, context, w_mix_t, w_q_t)


def _reference(query, context, w_linear):
    scores = jnp.einsum("bod,bkd->bok", query, context)
    weights = jax.nn.softmax(scores, axis=-1)
    mix = jnp.einsum("bok,bkd->bod", weights, context)
    combined = jnp.concatenate([mix, query], axis=-1)
    out = jnp.tanh(jnp.einsum("boc,dc->bod", combined, w_linear))
    return out, weights


if __name__ == "__main__":
    B, L_out, L_ctx, D = 2, 8, 8, 32

    key = jax.random.PRNGKey(0)
    kq, kc, kw = jax.random.split(key, 3)
    query = jax.random.normal(kq, (B, L_out, D), dtype=jnp.float32)
    context = jax.random.normal(kc, (B, L_ctx, D), dtype=jnp.float32)
    # Deterministic init for nn.Linear(2D -> D, bias=False): U(-1/sqrt(2D), 1/sqrt(2D))
    bound = 1.0 / jnp.sqrt(2.0 * D)
    w_linear = jax.random.uniform(kw, (D, 2 * D), dtype=jnp.float32,
                                  minval=-bound, maxval=bound)

    out, attn = attention_model(query, context, w_linear)
    out = jax.block_until_ready(out)
    attn = jax.block_until_ready(attn)

    ref_out, ref_attn = _reference(query, context, w_linear)
    assert jnp.allclose(out, ref_out, atol=1e-4, rtol=1e-4)
    assert jnp.allclose(attn, ref_attn, atol=1e-4, rtol=1e-4)

    print("KERNEL_OK")
</pallas_src>

<mosaic_0001>
module attributes {stable_mosaic.version = 11 : i64} {
  func.func @_attention_kernel(%arg0: i32, %arg1: memref<2x8x32xf32, #tpu.memory_space<vmem>>, %arg2: memref<2x8x32xf32, #tpu.memory_space<vmem>>, %arg3: memref<32x32xf32, #tpu.memory_space<vmem>>, %arg4: memref<32x32xf32, #tpu.memory_space<vmem>>, %arg5: memref<2x8x32xf32, #tpu.memory_space<vmem>>, %arg6: memref<2x8x8xf32, #tpu.memory_space<vmem>>) attributes {dimension_semantics = [#tpu.dimension_semantics<parallel>], iteration_bounds = array<i64: 1>, scalar_prefetch = 0 : i64, scratch_operands = 0 : i64, tpu.core_type = #tpu.core_type<tc>, window_params = [{transform_indices = @transform_0, window_bounds = array<i64: 2, 8, 32>}, {transform_indices = @transform_1, window_bounds = array<i64: 2, 8, 32>}, {pipeline_mode = #tpu.pipeline_mode<synchronous>, transform_indices = @transform_2, window_bounds = array<i64: 32, 32>}, {pipeline_mode = #tpu.pipeline_mode<synchronous>, transform_indices = @transform_3, window_bounds = array<i64: 32, 32>}, {transform_indices = @transform_4, window_bounds = array<i64: 2, 8, 32>}, {transform_indices = @transform_5, window_bounds = array<i64: 2, 8, 8>}]} {
    %c0 = arith.constant 0 : index
    %c0_0 = arith.constant 0 : index
    %c0_1 = arith.constant 0 : index
    %0 = vector.load %arg1[%c0, %c0_0, %c0_1] : memref<2x8x32xf32, #tpu.memory_space<vmem>>, vector<2x8x32xf32>
    %c0_2 = arith.constant 0 : index
    %c0_3 = arith.constant 0 : index
    %c0_4 = arith.constant 0 : index
    %1 = vector.load %arg2[%c0_2, %c0_3, %c0_4] : memref<2x8x32xf32, #tpu.memory_space<vmem>>, vector<2x8x32xf32>
    "tpu.trace_start"() <{level = 10 : i32, message = "bod,bkd->bok"}> : () -> ()
    %cst = arith.constant dense<0.000000e+00> : vector<2x8x8xf32>
    %2 = tpu.matmul %0, %1, %cst {dimension_numbers = #tpu.dot_dimension_numbers<[2], [2], [1], [1], [0, 0, 0, 1, 1, 1], [0], [0]>} : vector<2x8x32xf32>, vector<2x8x32xf32>, vector<2x8x8xf32> -> vector<2x8x8xf32>
    "tpu.trace_stop"() : () -> ()
    %cst_5 = arith.constant dense<0xFF800000> : vector<2x8xf32>
    %3 = vector.multi_reduction <maximumf>, %2, %cst_5 [2] : vector<2x8x8xf32> to vector<2x8xf32>
    %4 = vector.shape_cast %3 : vector<2x8xf32> to vector<2x8x1xf32>
    %5 = vector.broadcast %4 : vector<2x8x1xf32> to vector<2x8x8xf32>
    %6 = arith.subf %2, %5 : vector<2x8x8xf32>
    %7 = math.exp %6 : vector<2x8x8xf32>
    %cst_6 = arith.constant dense<0.000000e+00> : vector<2x8xf32>
    %8 = vector.multi_reduction <add>, %7, %cst_6 [2] : vector<2x8x8xf32> to vector<2x8xf32>
    %9 = vector.shape_cast %8 : vector<2x8xf32> to vector<2x8x1xf32>
    %10 = vector.broadcast %9 : vector<2x8x1xf32> to vector<2x8x8xf32>
    %11 = arith.divf %7, %10 : vector<2x8x8xf32>
    "tpu.trace_start"() <{level = 10 : i32, message = "bok,bkd->bod"}> : () -> ()
    %cst_7 = arith.constant dense<0.000000e+00> : vector<2x8x32xf32>
    %12 = tpu.matmul %11, %1, %cst_7 {dimension_numbers = #tpu.dot_dimension_numbers<[2], [1], [1], [2], [0, 0, 0, 1, 1, 2], [0], [0]>} : vector<2x8x8xf32>, vector<2x8x32xf32>, vector<2x8x32xf32> -> vector<2x8x32xf32>
    "tpu.trace_stop"() : () -> ()
    %c0_8 = arith.constant 0 : index
    %c0_9 = arith.constant 0 : index
    %13 = vector.load %arg3[%c0_8, %c0_9] : memref<32x32xf32, #tpu.memory_space<vmem>>, vector<32x32xf32>
    "tpu.trace_start"() <{level = 10 : i32, message = "bod,de->boe"}> : () -> ()
    %cst_10 = arith.constant dense<0.000000e+00> : vector<2x8x32xf32>
    %14 = tpu.matmul %12, %13, %cst_10 {dimension_numbers = #tpu.dot_dimension_numbers<[2], [0], [0, 1], [1], [0, 0, 0, 1, 1, 1], [], []>} : vector<2x8x32xf32>, vector<32x32xf32>, vector<2x8x32xf32> -> vector<2x8x32xf32>
    "tpu.trace_stop"() : () -> ()
    %c0_11 = arith.constant 0 : index
    %c0_12 = arith.constant 0 : index
    %15 = vector.load %arg4[%c0_11, %c0_12] : memref<32x32xf32, #tpu.memory_space<vmem>>, vector<32x32xf32>
    "tpu.trace_start"() <{level = 10 : i32, message = "bod,de->boe"}> : () -> ()
    %cst_13 = arith.constant dense<0.000000e+00> : vector<2x8x32xf32>
    %16 = tpu.matmul %0, %15, %cst_13 {dimension_numbers = #tpu.dot_dimension_numbers<[2], [0], [0, 1], [1], [0, 0, 0, 1, 1, 1], [], []>} : vector<2x8x32xf32>, vector<32x32xf32>, vector<2x8x32xf32> -> vector<2x8x32xf32>
    "tpu.trace_stop"() : () -> ()
    %17 = arith.addf %14, %16 : vector<2x8x32xf32>
    %18 = math.tanh %17 : vector<2x8x32xf32>
    %c0_14 = arith.constant 0 : index
    %c0_15 = arith.constant 0 : index
    %c0_16 = arith.constant 0 : index
    %19 = vector.load %arg5[%c0_14, %c0_15, %c0_16] : memref<2x8x32xf32, #tpu.memory_space<vmem>>, vector<2x8x32xf32>
    tpu.vector_store %arg5[%c0_14, %c0_15, %c0_16], %18 {strides = array<i32>} : memref<2x8x32xf32, #tpu.memory_space<vmem>>, vector<2x8x32xf32>,
    %c0_17 = arith.constant 0 : index
    %c0_18 = arith.constant 0 : index
    %c0_19 = arith.constant 0 : index
    %20 = vector.load %arg6[%c0_17, %c0_18, %c0_19] : memref<2x8x8xf32, #tpu.memory_space<vmem>>, vector<2x8x8xf32>
    tpu.vector_store %arg6[%c0_17, %c0_18, %c0_19], %11 {strides = array<i32>} : memref<2x8x8xf32, #tpu.memory_space<vmem>>, vector<2x8x8xf32>,
    return
  }
  func.func @transform_0(%arg0: i32) -> (i32, i32, i32) {
    %c0_i32 = arith.constant 0 : i32
    %c0_i32_0 = arith.constant 0 : i32
    %c0_i32_1 = arith.constant 0 : i32
    return %arg0, %c0_i32, %c0_i32_0 : i32, i32, i32
  }
  func.func @transform_1(%arg0: i32) -> (i32, i32, i32) {
    %c0_i32 = arith.constant 0 : i32
    %c0_i32_0 = arith.constant 0 : i32
    %c0_i32_1 = arith.constant 0 : i32
    return %arg0, %c0_i32, %c0_i32_0 : i32, i32, i32
  }
  func.func @transform_2(%arg0: i32) -> (i32, i32) {
    %c0_i32 = arith.constant 0 : i32
    %c0_i32_0 = arith.constant 0 : i32
    %c0_i32_1 = arith.constant 0 : i32
    return %c0_i32, %c0_i32_0 : i32, i32
  }
  func.func @transform_3(%arg0: i32) -> (i32, i32) {
    %c0_i32 = arith.constant 0 : i32
    %c0_i32_0 = arith.constant 0 : i32
    %c0_i32_1 = arith.constant 0 : i32
    return %c0_i32, %c0_i32_0 : i32, i32
  }
  func.func @transform_4(%arg0: i32) -> (i32, i32, i32) {
    %c0_i32 = arith.constant 0 : i32
    %c0_i32_0 = arith.constant 0 : i32
    %c0_i32_1 = arith.constant 0 : i32
    return %arg0, %c0_i32, %c0_i32_0 : i32, i32, i32
  }
  func.func @transform_5(%arg0: i32) -> (i32, i32, i32) {
    %c0_i32 = arith.constant 0 : i32
    %c0_i32_0 = arith.constant 0 : i32
    %c0_i32_1 = arith.constant 0 : i32
    return %arg0, %c0_i32, %c0_i32_0 : i32, i32, i32
  }
}

</mosaic_0001>

<llo_original>
// kernel: tpu_custom_call.1
$region0: #{tpu_custom_call.1}
  #allocation0 [shape = 'u32[]', space=smem, size = 0x4, offset = 0x4, fixed_abs, tag = 'smem constant byte address 0x4 - core index']
  #allocation1 [shape = 'u32[72,128]{1,0:T(1,128)}', space=vmem, size = 0x9000, scoped, tag = 'internal scratch']
  %s0 = inlined_call_operand.hbm [shape: f32[2,8,32], index: 0, kind: input, shape index: {}]
  %s1 = inlined_call_operand.hbm [shape: f32[2,8,32], index: 1, kind: input, shape index: {}]
  %s2 = inlined_call_operand.hbm [shape: f32[32,32], index: 2, kind: input, shape index: {}]
  %s3 = inlined_call_operand.hbm [shape: f32[32,32], index: 3, kind: input, shape index: {}]
  %s4 = inlined_call_operand.hbm [shape: f32[2,8,32], index: 4, kind: output, shape index: {0}]
  %s5 = inlined_call_operand.hbm [shape: f32[2,8,8], index: 5, kind: output, shape index: {1}]
  %6 = xla_tuple %s4, %s5
  %s7 = sld [smem:[#allocation0]]
  $region50: #{tpu_custom_call.1} parent=0
    _
  %s9 = ssub.s32 1, %s7
  %s10 = scalar_select 0, %s9, %s7
  $region1: #{tpu_custom_call.1} parent=0
    #allocation2 [shape = 'u8[8192]{0}', space=vmem, size = 0x2000, scoped, tag = 'input window, operand 0, single buffered']
    #allocation3 [shape = 's32[1]{0}', space=sflag, size = 0x4, scoped, tag = 'scoped memory for tpu_custom_call.1']
    #allocation4 [shape = 's32[1]{0}', space=sflag, size = 0x4, scoped, tag = 'scoped memory for tpu_custom_call.1']
    #allocation5 [shape = 'u8[8192]{0}', space=vmem, size = 0x2000, scoped, tag = 'input window, operand 1, single buffered']
    #allocation6 [shape = 's32[1]{0}', space=sflag, size = 0x4, scoped, tag = 'scoped memory for tpu_custom_call.1']
    #allocation7 [shape = 'u8[16384]{0}', space=vmem, size = 0x4000, scoped, tag = 'input window, operand 2, single buffered']
    #allocation8 [shape = 'u8[16384]{0}', space=vmem, size = 0x4000, scoped, tag = 'input window, operand 3, single buffered']
    #allocation9 [shape = 's32[1]{0}', space=sflag, size = 0x4, scoped, tag = 'scoped memory for tpu_custom_call.1']
    #allocation10 [shape = 'u8[8192]{0}', space=vmem, size = 0x2000, scoped, tag = 'output window, operand 0, single buffered']
    #allocation11 [shape = 'u8[8192]{0}', space=vmem, size = 0x2000, scoped, tag = 'output window, operand 1, single buffered']
    #allocation12 [shape = 's32[1]{0}', space=sflag, size = 0x4, scoped, tag = 'scoped memory for tpu_custom_call.1']
    %11 = vsyncpa [#allocation3], 0
    %12 = vsyncpa [#allocation6], 0
    %13 = vsyncpa [#allocation9], 0
    %14 = vsyncpa [#allocation4], 0
    %15 = vsyncpa [#allocation12], 0
    // Predicated region
    $region2: #{tpu_custom_call.1} parent=1 // pred_check
      _
    $region3: #{tpu_custom_call.1} parent=1 // pred_check_branch
      %17 = sbr.rel (0) target = $region5
    $region4: #{tpu_custom_call.1} parent=1 // pred_region
      %19 = vsyncadd [#allocation3], 0
      %s20 = sshll.u32 %s0, 4
      %s21 = int_to_ptr.hbm [resolvable:$true] %s20
      %s22 = sshll.u32 [#allocation2], 4
      %s23 = int_to_ptr.vmem [resolvable:$true] %s22
      %28 = dma.hbm_to_vmem [thread:$0]  %s21, 256, %s23, [#allocation3], 128, 128, 8
    $region5: #{tpu_custom_call.1} parent=1 // pred_fallthru
      _
    // Predicated region
    $region6: #{tpu_custom_call.1} parent=1 // pred_check
      _
    $region7: #{tpu_custom_call.1} parent=1 // pred_check_branch
      %30 = sbr.rel (0) target = $region9
    $region8: #{tpu_custom_call.1} parent=1 // pred_region
      %32 = vsyncadd [#allocation6], 0
      %s33 = sshll.u32 %s1, 4
      %s34 = int_to_ptr.hbm [resolvable:$true] %s33
      %s35 = sshll.u32 [#allocation5], 4
      %s36 = int_to_ptr.vmem [resolvable:$true] %s35
      %41 = dma.hbm_to_vmem [thread:$0]  %s34, 256, %s36, [#allocation6], 128, 128, 8
    $region9: #{tpu_custom_call.1} parent=1 // pred_fallthru
      _
    // Predicated region
    $region10: #{tpu_custom_call.1} parent=1 // pred_check
      _
    $region11: #{tpu_custom_call.1} parent=1 // pred_check_branch
      %43 = sbr.rel (0) target = $region13
    $region12: #{tpu_custom_call.1} parent=1 // pred_region
      %45 = vsyncadd [#allocation6], 0
      %s46 = sshll.u32 %s2, 4
      %s47 = int_to_ptr.hbm [resolvable:$true] %s46
      %s48 = sshll.u32 [#allocation7], 4
      %s49 = int_to_ptr.vmem [resolvable:$true] %s48
      %54 = dma.hbm_to_vmem [thread:$0]  %s47, 512, %s49, [#allocation6], 128, 128, 8
    $region13: #{tpu_custom_call.1} parent=1 // pred_fallthru
      _
    // Predicated region
    $region14: #{tpu_custom_call.1} parent=1 // pred_check
      _
    $region15: #{tpu_custom_call.1} parent=1 // pred_check_branch
      %56 = sbr.rel (0) target = $region17
    $region16: #{tpu_custom_call.1} parent=1 // pred_region
      %58 = vsyncadd [#allocation9], 0
      %s59 = sshll.u32 %s3, 4
      %s60 = int_to_ptr.hbm [resolvable:$true] %s59
      %s61 = sshll.u32 [#allocation8], 4
      %s62 = int_to_ptr.vmem [resolvable:$true] %s61
      %67 = dma.hbm_to_vmem [thread:$0]  %s60, 512, %s62, [#allocation9], 128, 128, 8
    $region17: #{tpu_custom_call.1} parent=1 // pred_fallthru
      _
    // Predicated region
    $region18: #{tpu_custom_call.1} parent=1 // pred_check
      _
    $region19: #{tpu_custom_call.1} parent=1 // pred_check_branch
      %69 = sbr.rel (0) target = $region21
    $region20: #{tpu_custom_call.1} parent=1 // pred_region
      %71 = dma.done [#allocation3], 256
    $region21: #{tpu_custom_call.1} parent=1 // pred_fallthru
      _
    // Predicated region
    $region22: #{tpu_custom_call.1} parent=1 // pred_check
      _
    $region23: #{tpu_custom_call.1} parent=1 // pred_check_branch
      %73 = sbr.rel (0) target = $region25
    $region24: #{tpu_custom_call.1} parent=1 // pred_region
      %75 = dma.done [#allocation6], 256
    $region25: #{tpu_custom_call.1} parent=1 // pred_fallthru
      _
    // Predicated region
    $region26: #{tpu_custom_call.1} parent=1 // pred_check
      _
    $region27: #{tpu_custom_call.1} parent=1 // pred_check_branch
      %77 = sbr.rel (0) target = $region29
    $region28: #{tpu_custom_call.1} parent=1 // pred_region
      %79 = dma.done [#allocation6], 512
    $region29: #{tpu_custom_call.1} parent=1 // pred_fallthru
      _
    // Predicated region
    $region30: #{tpu_custom_call.1} parent=1 // pred_check
      _
    $region31: #{tpu_custom_call.1} parent=1 // pred_check_branch
      %81 = sbr.rel (0) target = $region33
    $region32: #{tpu_custom_call.1} parent=1 // pred_region
      %83 = dma.done [#allocation9], 512
    $region33: #{tpu_custom_call.1} parent=1 // pred_fallthru
      _
    %v84 = vld [vmem:[#allocation2] sm:$0xff]
    %v85 = vld [vmem:[#allocation2 + $0x8] sm:$0xff]
    %v86 = vld [vmem:[#allocation5] sm:$0xff]
    %v87 = vld [vmem:[#allocation5 + $0x8] sm:$0xff]
    %vm88 = vcmask 261120
    %v90 = vsel %vm88, %v84, 0
    %v93 = vsel %vm88, %v86, 0
    %95 = vmatpush.xpose.msra.mxu0 0.0
    %96 = vmatpush.xpose.msra.mxu0 0.0
    %97 = vmatpush.xpose.msra.mxu0 0.0
    %98 = vmatpush.xpose.msra.mxu0 0.0
    %99 = vmatpush.xpose.msra.mxu0 0.0
    %100 = vmatpush.xpose.msra.mxu0 0.0
    %101 = vmatpush.xpose.msra.mxu0 0.0
    %102 = vmatpush.xpose.msra.mxu0 0.0
    %103 = vmatpush.xpose.msra.mxu0 0.0
    %104 = vmatpush.xpose.msra.mxu0 0.0
    %105 = vmatpush.xpose.msra.mxu0 0.0
    %106 = vmatpush.xpose.msra.mxu0 0.0
    %107 = vmatpush.xpose.msra.mxu0 0.0
    %108 = vmatpush.xpose.msra.mxu0 0.0
    %109 = vmatpush.xpose.msra.mxu0 0.0
    %110 = vmatpush.xpose.msra.mxu0 %v93
    %111 = vmatmul.f32.gmra.mxu0 %v90
    %v112 = vpop.f32.mrf.mxu0
    %v113 = vadd.f32 0.0, %v112
    %114 = vdwg.mxu0
    %v116 = vsel %vm88, %v85, 0
    %v119 = vsel %vm88, %v87, 0
    %121 = vmatpush.xpose.msra.mxu0 0.0
    %122 = vmatpush.xpose.msra.mxu0 0.0
    %123 = vmatpush.xpose.msra.mxu0 0.0
    %124 = vmatpush.xpose.msra.mxu0 0.0
    %125 = vmatpush.xpose.msra.mxu0 0.0
    %126 = vmatpush.xpose.msra.mxu0 0.0
    %127 = vmatpush.xpose.msra.mxu0 0.0
    %128 = vmatpush.xpose.msra.mxu0 0.0
    %129 = vmatpush.xpose.msra.mxu0 0.0
    %130 = vmatpush.xpose.msra.mxu0 0.0
    %131 = vmatpush.xpose.msra.mxu0 0.0
    %132 = vmatpush.xpose.msra.mxu0 0.0
    %133 = vmatpush.xpose.msra.mxu0 0.0
    %134 = vmatpush.xpose.msra.mxu0 0.0
    %135 = vmatpush.xpose.msra.mxu0 0.0
    %136 = vmatpush.xpose.msra.mxu0 %v119
    %137 = vmatmul.f32.gmra.mxu0 %v116
    %v138 = vpop.f32.mrf.mxu0
    %v139 = vadd.f32 0.0, %v138
    %140 = vdwg.mxu0
    %vm141 = vcmask 64512
    %v142 = vsel %vm141, %v113, -inf
    %143 = vmax.xlane.f32.xlu0 %v142
    %v144 = vpop.xlane.xlu0 %143
    %v145 = vsel %vm141, %v139, -inf
    %146 = vmax.xlane.f32.xlu0 %v145
    %v147 = vpop.xlane.xlu0 %146
    %v148 = vsub.f32 %v113, %v144
    %v149 = vsub.f32 %v139, %v147
    %v150 = vmul.f32 %v148, 1.442695
    %v151 = vpow.pop %v150
    %v152 = vmul.f32 %v149, 1.442695
    %v153 = vpow.pop %v152
    %v154 = vsel %vm141, %v151, 0.0
    %155 = vadd.xlane.f32.xlu0 %v154
    %v156 = vpop.xlane.xlu0 %155
    %v157 = vsel %vm141, %v153, 0.0
    %158 = vadd.xlane.f32.xlu0 %v157
    %v159 = vpop.xlane.xlu0 %158
    %v160 = vrcp.pop %v156
    %v161 = vmul.f32 %v156, %v160
    %v162 = vsub.f32 1.0, %v161
    %v163 = vmul.f32 %v160, %v162
    %v164 = vadd.f32 %v160, %v163
    %vm165 = vweird.f32 %v156
    %vm166 = vweird.f32 %v160
    %vm167 = vmor %vm165, %vm166
    %v168 = vsel %vm167, %v160, %v164
    %v169 = vand.u32 2147483647, %v156
    %vm170 = vcmp.eq.f32.partialorder %v169, 8.507059e+37
    %v171 = vand.u32 %v156, 2147483648
    %v172 = vor.u32 1.1754944e-38, %v171
    %v173 = vsel %vm170, %v172, %v168
    %v174 = vmul.f32 %v151, %v173
    %v175 = vrcp.pop %v159
    %v176 = vmul.f32 %v159, %v175
    %v177 = vsub.f32 1.0, %v176
    %v178 = vmul.f32 %v175, %v177
    %v179 = vadd.f32 %v175, %v178
    %vm180 = vweird.f32 %v159
    %vm181 = vweird.f32 %v175
    %vm182 = vmor %vm180, %vm181
    %v183 = vsel %vm182, %v175, %v179
    %v184 = vand.u32 2147483647, %v159
    %vm185 = vcmp.eq.f32.partialorder %v184, 8.507059e+37
    %v186 = vand.u32 %v159, 2147483648
    %v187 = vor.u32 1.1754944e-38, %v186
    %v188 = vsel %vm185, %v187, %v183
    %v189 = vmul.f32 %v153, %v188
    %v191 = vsel %vm141, %v174, 0
    %193 = vmatpush.msra.mxu0 0.0
    %194 = vmatpush.msra.mxu0 0.0
    %195 = vmatpush.msra.mxu0 0.0
    %196 = vmatpush.msra.mxu0 0.0
    %197 = vmatpush.msra.mxu0 0.0
    %198 = vmatpush.msra.mxu0 0.0
    %199 = vmatpush.msra.mxu0 0.0
    %200 = vmatpush.msra.mxu0 0.0
    %201 = vmatpush.msra.mxu0 0.0
    %202 = vmatpush.msra.mxu0 0.0
    %203 = vmatpush.msra.mxu0 0.0
    %204 = vmatpush.msra.mxu0 0.0
    %205 = vmatpush.msra.mxu0 0.0
    %206 = vmatpush.msra.mxu0 0.0
    %207 = vmatpush.msra.mxu0 0.0
    %208 = vmatpush.msra.mxu0 %v86
    %209 = vmatmul.f32.gmra.mxu0 %v191
    %v210 = vpop.f32.mrf.mxu0
    %v211 = vadd.f32 0.0, %v210
    %212 = vdwg.mxu0
    %v214 = vsel %vm141, %v189, 0
    %216 = vmatpush.msra.mxu0 0.0
    %217 = vmatpush.msra.mxu0 0.0
    %218 = vmatpush.msra.mxu0 0.0
    %219 = vmatpush.msra.mxu0 0.0
    %220 = vmatpush.msra.mxu0 0.0
    %221 = vmatpush.msra.mxu0 0.0
    %222 = vmatpush.msra.mxu0 0.0
    %223 = vmatpush.msra.mxu0 0.0
    %224 = vmatpush.msra.mxu0 0.0
    %225 = vmatpush.msra.mxu0 0.0
    %226 = vmatpush.msra.mxu0 0.0
    %227 = vmatpush.msra.mxu0 0.0
    %228 = vmatpush.msra.mxu0 0.0
    %229 = vmatpush.msra.mxu0 0.0
    %230 = vmatpush.msra.mxu0 0.0
    %231 = vmatpush.msra.mxu0 %v87
    %232 = vmatmul.f32.gmra.mxu0 %v214
    %v233 = vpop.f32.mrf.mxu0
    %v234 = vadd.f32 0.0, %v233
    %235 = vdwg.mxu0
    %v236 = vld [vmem:[#allocation7] sm:$0xff]
    %v237 = vld [vmem:[#allocation7 + $0x8] sm:$0xff]
    %v238 = vld [vmem:[#allocation7 + $0x10] sm:$0xff]
    %v239 = vld [vmem:[#allocation7 + $0x18] sm:$0xff]
    %v240 = vld [vmem:[#allocation8] sm:$0xff]
    %v241 = vld [vmem:[#allocation8 + $0x8] sm:$0xff]
    %v242 = vld [vmem:[#allocation8 + $0x10] sm:$0xff]
    %v243 = vld [vmem:[#allocation8 + $0x18] sm:$0xff]
    %244 = vmatpush.msra.mxu0 0.0
    %245 = vmatpush.msra.mxu0 0.0
    %246 = vmatpush.msra.mxu0 0.0
    %247 = vmatpush.msra.mxu0 0.0
    %248 = vmatpush.msra.mxu0 0.0
    %249 = vmatpush.msra.mxu0 0.0
    %250 = vmatpush.msra.mxu0 0.0
    %251 = vmatpush.msra.mxu0 0.0
    %252 = vmatpush.msra.mxu0 0.0
    %253 = vmatpush.msra.mxu0 0.0
    %254 = vmatpush.msra.mxu0 0.0
    %255 = vmatpush.msra.mxu0 0.0
    %256 = vmatpush.msra.mxu0 %v243
    %257 = vmatpush.msra.mxu0 %v242
    %258 = vmatpush.msra.mxu0 %v241
    %259 = vmatpush.msra.mxu0 %v240
    %260 = vmatmul.f32.gmra.mxu0 %v90
    %v261 = vpop.f32.mrf.mxu0
    %v262 = vadd.f32 0.0, %v261
    %263 = vmatmul.f32.gmra.mxu0 %v116
    %v264 = vpop.f32.mrf.mxu0
    %v265 = vadd.f32 0.0, %v264
    %266 = vdwg.mxu0
    %v268 = vsel %vm88, %v211, 0
    %v271 = vsel %vm88, %v234, 0
    %273 = vmatpush.msra.mxu0 0.0
    %274 = vmatpush.msra.mxu0 0.0
    %275 = vmatpush.msra.mxu0 0.0
    %276 = vmatpush.msra.mxu0 0.0
    %277 = vmatpush.msra.mxu0 0.0
    %278 = vmatpush.msra.mxu0 0.0
    %279 = vmatpush.msra.mxu0 0.0
    %280 = vmatpush.msra.mxu0 0.0
    %281 = vmatpush.msra.mxu0 0.0
    %282 = vmatpush.msra.mxu0 0.0
    %283 = vmatpush.msra.mxu0 0.0
    %284 = vmatpush.msra.mxu0 0.0
    %285 = vmatpush.msra.mxu0 %v239
    %286 = vmatpush.msra.mxu0 %v238
    %287 = vmatpush.msra.mxu0 %v237
    %288 = vmatpush.msra.mxu0 %v236
    %289 = vmatmul.f32.gmra.mxu0 %v268
    %v290 = vpop.f32.mrf.mxu0
    %v291 = vadd.f32 %v262, %v290
    %292 = vmatmul.f32.gmra.mxu0 %v271
    %v293 = vpop.f32.mrf.mxu0
    %v294 = vadd.f32 %v265, %v293
    %295 = vdwg.mxu0
    %v296 = vtanh.pop %v291
    %v297 = vtanh.pop %v294
    %298 = vst.msk [vmem:[#allocation10] sm:$0xff] %vm88, %v296
    %299 = vst.msk [vmem:[#allocation10 + $0x8] sm:$0xff] %vm88, %v297
    %300 = vst.msk [vmem:[#allocation11] sm:$0xff] %vm141, %v174
    %301 = vst.msk [vmem:[#allocation11 + $0x8] sm:$0xff] %vm141, %v189
    // Predicated region
    $region34: #{tpu_custom_call.1} parent=1 // pred_check
      _
    $region35: #{tpu_custom_call.1} parent=1 // pred_check_branch
      %303 = sbr.rel (0) target = $region37
    $region36: #{tpu_custom_call.1} parent=1 // pred_region
      %305 = vsyncadd [#allocation4], 0
      %s306 = sshll.u32 [#allocation10], 4
      %s307 = int_to_ptr.vmem [resolvable:$true] %s306
      %s308 = sshll.u32 %s4, 4
      %s309 = int_to_ptr.hbm [resolvable:$true] %s308
      %314 = dma.vmem_to_hbm [thread:$0]  %s307, 256, %s309, [#allocation4], 128, 128, 8
    $region37: #{tpu_custom_call.1} parent=1 // pred_fallthru
      _
    // Predicated region
    $region38: #{tpu_custom_call.1} parent=1 // pred_check
      _
    $region39: #{tpu_custom_call.1} parent=1 // pred_check_branch
      %316 = sbr.rel (0) target = $region41
    $region40: #{tpu_custom_call.1} parent=1 // pred_region
      %318 = vsyncadd [#allocation12], 0
      %s319 = sshll.u32 [#allocation11], 4
      %s320 = int_to_ptr.vmem [resolvable:$true] %s319
      %s321 = sshll.u32 %s5, 4
      %s322 = int_to_ptr.hbm [resolvable:$true] %s321
      %327 = dma.vmem_to_hbm [thread:$0]  %s320, 256, %s322, [#allocation12], 128, 128, 8
    $region41: #{tpu_custom_call.1} parent=1 // pred_fallthru
      _
    // Predicated region
    $region42: #{tpu_custom_call.1} parent=1 // pred_check
      _
    $region43: #{tpu_custom_call.1} parent=1 // pred_check_branch
      %329 = sbr.rel (0) target = $region45
    $region44: #{tpu_custom_call.1} parent=1 // pred_region
      %331 = dma.done [#allocation4], 256
    $region45: #{tpu_custom_call.1} parent=1 // pred_fallthru
      _
    // Predicated region
    $region46: #{tpu_custom_call.1} parent=1 // pred_check
      _
    $region47: #{tpu_custom_call.1} parent=1 // pred_check_branch
      %333 = sbr.rel (0) target = $region49
    $region48: #{tpu_custom_call.1} parent=1 // pred_region
      %335 = dma.done [#allocation12], 256
    $region49: #{tpu_custom_call.1} parent=1 // pred_fallthru
      _
    %336 = vsyncpa [#allocation3], 1
    %337 = vsyncpa [#allocation6], 1
    %338 = vsyncpa [#allocation9], 1
    %339 = vsyncpa [#allocation4], 1
    %340 = vsyncpa [#allocation12], 1

</llo_original>
